<compile_context>
chip_gen: v7x
topology: tpu7x:2x2x1
jax: 0.10.0
libtpu: 0.0.40
codegen_flags: <defaults>
</compile_context>

<pallas_src>
import jax
import jax.numpy as jnp
from jax.experimental import pallas as pl
from jax.experimental.pallas import tpu as pltpu

# ---- module configuration (matches QRDuelMLP.__init__ arguments) ------------
N_IN = 16                      # input_dims[0]
WIDTH = 32                     # width
DEPTH = 2                      # depth of the base stream
N_ACTIONS = 4                  # n_actions
N_QUANTILES = 8                # n_quantiles
OUT_FLAT = N_ACTIONS * N_QUANTILES   # 32

# ---- packing / tiling configuration ------------------------------------------
PAD_K = 2 * WIDTH              # per-layer fan-in rows in the slab (max fan_in = 64)
SLAB_N = 2 * WIDTH             # slab lane width (max fan_out = 64)
N_PACKED_LAYERS = 4            # base0, base1, merged V|A hidden, folded output
SLAB_ROWS = N_PACKED_LAYERS * PAD_K   # 256
TILE_B = 128                   # batch tile: one full MXU M pass (v5e); fine on v6e/v7x

BATCH = 256                    # example batch (2 grid steps -> both v7x TCs busy)


# ---- Pallas kernel -----------------------------------------------------------
def qrduel_kernel(x_ref, w_ref, b_ref, q_ref):
    """x:(TB,N_IN) f32, w:(256,64) bf16|f32 slab, b:(4,64) f32 slab, q:(TB,32) f32."""
    f32 = jnp.float32
    wdt = w_ref.dtype  # bf16 in production, f32 for the validation path

    r1, r2, r3 = PAD_K, 2 * PAD_K, 3 * PAD_K

    # layer 0: (TB, N_IN) -> (TB, W), Linear + ReLU   (base stream)
    x = x_ref[...].astype(wdt)
    h = jnp.dot(x, w_ref[0:N_IN, 0:WIDTH], preferred_element_type=f32)
    h = jnp.maximum(h + b_ref[0:1, 0:WIDTH], 0.0)

    # layer 1: (TB, W) -> (TB, W), Linear + ReLU      (base stream)
    h = jnp.dot(h.astype(wdt), w_ref[r1:r1 + WIDTH, 0:WIDTH],
                preferred_element_type=f32)
    h = jnp.maximum(h + b_ref[1:2, 0:WIDTH], 0.0)

    # layer 2: merged V|A hidden, (TB, W) -> (TB, 2W), Linear + ReLU
    g = jnp.dot(h.astype(wdt), w_ref[r2:r2 + WIDTH, 0:2 * WIDTH],
                preferred_element_type=f32)
    g = jnp.maximum(g + b_ref[2:3, 0:2 * WIDTH], 0.0)

    # layer 3: folded output, (TB, 2W) -> (TB, A*Q) == Q_flat (dueling combine
    # already baked into the weights).  Single store.
    q = jnp.dot(g.astype(wdt), w_ref[r3:r3 + 2 * WIDTH, 0:OUT_FLAT],
                preferred_element_type=f32)
    q_ref[...] = q + b_ref[3:4, 0:OUT_FLAT]


# ---- trace-time weight folding / packing ------------------------------------
def _fold_output_weights(wv1, bv1, wa1, ba1):
    """Fold V-broadcast and mean-over-actions centering into the final weights."""
    hp = jax.lax.Precision.HIGHEST
    eye_q = jnp.eye(N_QUANTILES, dtype=jnp.float32)
    # T[q, a*Q+q'] = delta(q, q')  -> broadcasts V across the A action blocks
    t_mat = jnp.tile(eye_q, (1, N_ACTIONS))                              # (Q, A*Q)
    # C = I - (1/A) * (ones(A,A) kron I_Q)  -> centers A over the action axis
    c_mat = (jnp.eye(OUT_FLAT, dtype=jnp.float32)
             - jnp.kron(jnp.ones((N_ACTIONS, N_ACTIONS), jnp.float32) / N_ACTIONS,
                        eye_q))                                          # (A*Q, A*Q)
    w_out = jnp.concatenate([jnp.dot(wv1, t_mat, precision=hp),
                             jnp.dot(wa1, c_mat, precision=hp)], axis=0)  # (2W, A*Q)
    b_out = (jnp.dot(bv1, t_mat, precision=hp)
             + jnp.dot(ba1, c_mat, precision=hp))                         # (1, A*Q)
    return w_out, b_out


def pack_params(p, weight_dtype=jnp.bfloat16):
    """Merge V/A streams, fold the dueling combine, and pack into 2 slabs.

    Weight slab: (4*PAD_K, SLAB_N) = (256, 64); layer l occupies rows
    [l*PAD_K : l*PAD_K + fan_in, 0 : fan_out] (zero padded elsewhere).
    Bias slab:   (4, SLAB_N); row l holds layer l's bias in cols [0:fan_out].
    """
    w_hidden = jnp.concatenate([p["wv0"], p["wa0"]], axis=1)   # (W, 2W)
    b_hidden = jnp.concatenate([p["bv0"], p["ba0"]], axis=1)   # (1, 2W)
    w_out, b_out = _fold_output_weights(p["wv1"], p["bv1"], p["wa1"], p["ba1"])

    layers = [(p["wb0"], p["bb0"]), (p["wb1"], p["bb1"]),
              (w_hidden, b_hidden), (w_out, b_out)]

    w_rows, b_rows = [], []
    for w, b in layers:
        w_rows.append(jnp.pad(w, ((0, PAD_K - w.shape[0]),
                                  (0, SLAB_N - w.shape[1]))))
        b_rows.append(jnp.pad(b, ((0, 0), (0, SLAB_N - b.shape[1]))))
    w_slab = jnp.concatenate(w_rows, axis=0).astype(weight_dtype)   # (256, 64)
    b_slab = jnp.concatenate(b_rows, axis=0).astype(jnp.float32)    # (4, 64)
    return w_slab, b_slab


# ---- wrapper -----------------------------------------------------------------
def qrduel_forward(state, w_slab, b_slab, *, tb=TILE_B):
    b = state.shape[0]
    n_tiles = pl.cdiv(b, tb)
    bp = n_tiles * tb
    if bp != b:  # pad batch up to a whole number of tiles (sliced off below)
        state = jnp.pad(state, ((0, bp - b), (0, 0)))

    # Advisory cost estimate: 4 matmuls per row, no transcendentals.
    flops = 2 * bp * (N_IN * WIDTH + WIDTH * WIDTH
                      + WIDTH * (2 * WIDTH) + (2 * WIDTH) * OUT_FLAT)
    bytes_accessed = int(state.size * 4
                         + w_slab.size * jnp.dtype(w_slab.dtype).itemsize
                         + b_slab.size * 4
                         + bp * OUT_FLAT * 4)
    ce = pl.CostEstimate(flops=flops, transcendentals=0,
                         bytes_accessed=bytes_accessed)

    q_flat = pl.pallas_call(
        qrduel_kernel,
        out_shape=jax.ShapeDtypeStruct((bp, OUT_FLAT), jnp.float32),
        grid=(n_tiles,),
        in_specs=[
            pl.BlockSpec((tb, N_IN), lambda i: (i, 0)),            # batch-tiled input
            pl.BlockSpec((SLAB_ROWS, SLAB_N), lambda i: (0, 0)),   # weights: resident
            pl.BlockSpec((N_PACKED_LAYERS, SLAB_N), lambda i: (0, 0)),  # biases: resident
        ],
        out_specs=pl.BlockSpec((tb, OUT_FLAT), lambda i: (i, 0)),
        compiler_params=pltpu.CompilerParams(
            dimension_semantics=("parallel",)),                    # megacore on v7x
        cost_estimate=ce,
    )(state, w_slab, b_slab)

    # Free layout plumbing in the wrapper (kernel stays a single dense store).
    return q_flat[:b].reshape(b, N_ACTIONS, N_QUANTILES)


# ---- deterministic parameter init (PyTorch nn.Linear-style uniform) ---------
def init_linear(key, n_in, n_out):
    kw, kb = jax.random.split(key)
    bound = 1.0 / float(n_in) ** 0.5
    w = jax.random.uniform(kw, (n_in, n_out), jnp.float32, -bound, bound)
    b = jax.random.uniform(kb, (1, n_out), jnp.float32, -bound, bound)
    return w, b


def make_params(key):
    keys = jax.random.split(key, 6)
    p = {}
    p["wb0"], p["bb0"] = init_linear(keys[0], N_IN, WIDTH)
    p["wb1"], p["bb1"] = init_linear(keys[1], WIDTH, WIDTH)
    p["wv0"], p["bv0"] = init_linear(keys[2], WIDTH, WIDTH)
    p["wv1"], p["bv1"] = init_linear(keys[3], WIDTH, N_QUANTILES)
    p["wa0"], p["ba0"] = init_linear(keys[4], WIDTH, WIDTH)
    p["wa1"], p["ba1"] = init_linear(keys[5], WIDTH, N_ACTIONS * N_QUANTILES)
    return p


# ---- pure-JAX reference (mirrors the original PyTorch forward exactly) -------
def reference_forward(state, p):
    hp = jax.lax.Precision.HIGHEST
    h = jnp.maximum(jnp.dot(state, p["wb0"], precision=hp) + p["bb0"], 0.0)
    h = jnp.maximum(jnp.dot(h, p["wb1"], precision=hp) + p["bb1"], 0.0)
    v = jnp.maximum(jnp.dot(h, p["wv0"], precision=hp) + p["bv0"], 0.0)
    v = jnp.dot(v, p["wv1"], precision=hp) + p["bv1"]
    a = jnp.maximum(jnp.dot(h, p["wa0"], precision=hp) + p["ba0"], 0.0)
    a = jnp.dot(a, p["wa1"], precision=hp) + p["ba1"]
    v3 = v.reshape(-1, 1, N_QUANTILES)
    a3 = a.reshape(-1, N_ACTIONS, N_QUANTILES)
    return v3 + a3 - a3.mean(axis=1, keepdims=True)


if __name__ == "__main__":
    key = jax.random.PRNGKey(0)
    k_state, k_params = jax.random.split(key)

    state = jax.random.normal(k_state, (BATCH, N_IN), jnp.float32)
    params = make_params(k_params)

    q_ref = reference_forward(state, params)

    # 1) f32 weight slab: validates stream-merge + dueling-fold algebra tightly.
    w32, b32 = pack_params(params, weight_dtype=jnp.float32)
    q32 = jax.block_until_ready(qrduel_forward(state, w32, b32))
    assert q32.shape == (BATCH, N_ACTIONS, N_QUANTILES)
    assert jnp.allclose(q32, q_ref, rtol=1e-2, atol=1e-2), \
        "f32 kernel mismatch vs reference"

    # 2) bf16 weight slab: the MXU-native production path (v5e/v6e/v7x).
    wbf, bbf = pack_params(params, weight_dtype=jnp.bfloat16)
    qbf = jax.block_until_ready(qrduel_forward(state, wbf, bbf))
    assert qbf.shape == (BATCH, N_ACTIONS, N_QUANTILES)
    assert jnp.allclose(qbf, q_ref, rtol=5e-2, atol=5e-2), \
        "bf16 kernel mismatch vs reference"

    print("KERNEL_OK")
</pallas_src>

<mosaic_0001>
module attributes {stable_mosaic.version = 11 : i64} {
  func.func @qrduel_kernel(%arg0: i32, %arg1: memref<128x16xf32, #tpu.memory_space<vmem>>, %arg2: memref<256x64xf32, #tpu.memory_space<vmem>>, %arg3: memref<4x64xf32, #tpu.memory_space<vmem>>, %arg4: memref<128x32xf32, #tpu.memory_space<vmem>>) attributes {dimension_semantics = [#tpu.dimension_semantics<parallel>], iteration_bounds = array<i64: 2>, scalar_prefetch = 0 : i64, scratch_operands = 0 : i64, tpu.core_type = #tpu.core_type<tc>, window_params = [{transform_indices = @transform_0, window_bounds = array<i64: 128, 16>}, {pipeline_mode = #tpu.pipeline_mode<synchronous>, transform_indices = @transform_1, window_bounds = array<i64: 256, 64>}, {pipeline_mode = #tpu.pipeline_mode<synchronous>, transform_indices = @transform_2, window_bounds = array<i64: 4, 64>}, {transform_indices = @transform_3, window_bounds = array<i64: 128, 32>}]} {
    %c0 = arith.constant 0 : index
    %c0_0 = arith.constant 0 : index
    %0 = vector.load %arg1[%c0, %c0_0] : memref<128x16xf32, #tpu.memory_space<vmem>>, vector<128x16xf32>
    %c0_1 = arith.constant 0 : index
    %c0_2 = arith.constant 0 : index
    %1 = vector.load %arg2[%c0_1, %c0_2] : memref<256x64xf32, #tpu.memory_space<vmem>>, vector<16x32xf32>
    %cst = arith.constant dense<0.000000e+00> : vector<128x32xf32>
    %2 = tpu.matmul %0, %1, %cst {dimension_numbers = #tpu.dot_dimension_numbers<[1], [0], [0], [1], [0, 0, 1, 1], [], []>} : vector<128x16xf32>, vector<16x32xf32>, vector<128x32xf32> -> vector<128x32xf32>
    %c0_3 = arith.constant 0 : index
    %c0_4 = arith.constant 0 : index
    %3 = vector.load %arg3[%c0_3, %c0_4] : memref<4x64xf32, #tpu.memory_space<vmem>>, vector<1x32xf32>
    %4 = vector.broadcast %3 : vector<1x32xf32> to vector<128x32xf32>
    %5 = arith.addf %2, %4 : vector<128x32xf32>
    %cst_5 = arith.constant 0.000000e+00 : f32
    %6 = vector.broadcast %cst_5 : f32 to vector<128x32xf32>
    %7 = arith.maximumf %5, %6 : vector<128x32xf32>
    %c64 = arith.constant 64 : index
    %c0_6 = arith.constant 0 : index
    %8 = vector.load %arg2[%c64, %c0_6] : memref<256x64xf32, #tpu.memory_space<vmem>>, vector<32x32xf32>
    %cst_7 = arith.constant dense<0.000000e+00> : vector<128x32xf32>
    %9 = tpu.matmul %7, %8, %cst_7 {dimension_numbers = #tpu.dot_dimension_numbers<[1], [0], [0], [1], [0, 0, 1, 1], [], []>} : vector<128x32xf32>, vector<32x32xf32>, vector<128x32xf32> -> vector<128x32xf32>
    %c1 = arith.constant 1 : index
    %c0_8 = arith.constant 0 : index
    %10 = vector.load %arg3[%c1, %c0_8] : memref<4x64xf32, #tpu.memory_space<vmem>>, vector<1x32xf32>
    %11 = vector.broadcast %10 : vector<1x32xf32> to vector<128x32xf32>
    %12 = arith.addf %9, %11 : vector<128x32xf32>
    %cst_9 = arith.constant 0.000000e+00 : f32
    %13 = vector.broadcast %cst_9 : f32 to vector<128x32xf32>
    %14 = arith.maximumf %12, %13 : vector<128x32xf32>
    %c128 = arith.constant 128 : index
    %c0_10 = arith.constant 0 : index
    %15 = vector.load %arg2[%c128, %c0_10] : memref<256x64xf32, #tpu.memory_space<vmem>>, vector<32x64xf32>
    %cst_11 = arith.constant dense<0.000000e+00> : vector<128x64xf32>
    %16 = tpu.matmul %14, %15, %cst_11 {dimension_numbers = #tpu.dot_dimension_numbers<[1], [0], [0], [1], [0, 0, 1, 1], [], []>} : vector<128x32xf32>, vector<32x64xf32>, vector<128x64xf32> -> vector<128x64xf32>
    %c2 = arith.constant 2 : index
    %c0_12 = arith.constant 0 : index
    %17 = vector.load %arg3[%c2, %c0_12] : memref<4x64xf32, #tpu.memory_space<vmem>>, vector<1x64xf32>
    %18 = vector.broadcast %17 : vector<1x64xf32> to vector<128x64xf32>
    %19 = arith.addf %16, %18 : vector<128x64xf32>
    %cst_13 = arith.constant 0.000000e+00 : f32
    %20 = vector.broadcast %cst_13 : f32 to vector<128x64xf32>
    %21 = arith.maximumf %19, %20 : vector<128x64xf32>
    %c192 = arith.constant 192 : index
    %c0_14 = arith.constant 0 : index
    %22 = vector.load %arg2[%c192, %c0_14] : memref<256x64xf32, #tpu.memory_space<vmem>>, vector<64x32xf32>
    %cst_15 = arith.constant dense<0.000000e+00> : vector<128x32xf32>
    %23 = tpu.matmul %21, %22, %cst_15 {dimension_numbers = #tpu.dot_dimension_numbers<[1], [0], [0], [1], [0, 0, 1, 1], [], []>} : vector<128x64xf32>, vector<64x32xf32>, vector<128x32xf32> -> vector<128x32xf32>
    %c3 = arith.constant 3 : index
    %c0_16 = arith.constant 0 : index
    %24 = vector.load %arg3[%c3, %c0_16] : memref<4x64xf32, #tpu.memory_space<vmem>>, vector<1x32xf32>
    %25 = vector.broadcast %24 : vector<1x32xf32> to vector<128x32xf32>
    %26 = arith.addf %23, %25 : vector<128x32xf32>
    %c0_17 = arith.constant 0 : index
    %c0_18 = arith.constant 0 : index
    %27 = vector.load %arg4[%c0_17, %c0_18] : memref<128x32xf32, #tpu.memory_space<vmem>>, vector<128x32xf32>
    tpu.vector_store %arg4[%c0_17, %c0_18], %26 {strides = array<i32>} : memref<128x32xf32, #tpu.memory_space<vmem>>, vector<128x32xf32>,
    return
  }
  func.func @transform_0(%arg0: i32) -> (i32, i32) {
    %c0_i32 = arith.constant 0 : i32
    %c0_i32_0 = arith.constant 0 : i32
    return %arg0, %c0_i32 : i32, i32
  }
  func.func @transform_1(%arg0: i32) -> (i32, i32) {
    %c0_i32 = arith.constant 0 : i32
    %c0_i32_0 = arith.constant 0 : i32
    %c0_i32_1 = arith.constant 0 : i32
    return %c0_i32, %c0_i32_0 : i32, i32
  }
  func.func @transform_2(%arg0: i32) -> (i32, i32) {
    %c0_i32 = arith.constant 0 : i32
    %c0_i32_0 = arith.constant 0 : i32
    %c0_i32_1 = arith.constant 0 : i32
    return %c0_i32, %c0_i32_0 : i32, i32
  }
  func.func @transform_3(%arg0: i32) -> (i32, i32) {
    %c0_i32 = arith.constant 0 : i32
    %c0_i32_0 = arith.constant 0 : i32
    return %arg0, %c0_i32 : i32, i32
  }
}

</mosaic_0001>

<llo_original>
// kernel: tpu_custom_call.1
$region0: #{tpu_custom_call.1}
  #allocation0 [shape = 'u32[]', space=smem, size = 0x4, offset = 0x4, fixed_abs, tag = 'smem constant byte address 0x4 - core index']
  #allocation1 [shape = 'u32[144,128]{1,0:T(1,128)}', space=vmem, size = 0x12000, scoped, tag = 'internal scratch']
  %s0 = inlined_call_operand.vmem [shape: f32[256,16], index: 0, kind: input, shape index: {}]
  %s1 = inlined_call_operand.vmem [shape: f32[256,64], index: 1, kind: input, shape index: {}]
  %s2 = inlined_call_operand.vmem [shape: f32[4,64], index: 2, kind: input, shape index: {}]
  %s3 = inlined_call_operand.vmem [shape: f32[256,32], index: 3, kind: output, shape index: {}]
  %s4 = sld [smem:[#allocation0]]
  $region45: #{tpu_custom_call.1} parent=0
    _
  %s6 = ssub.s32 1, %s4
  %s7 = scalar_select 0, %s6, %s4
  loop: start=0, step=1, limit=4
  $region2: #{tpu_custom_call.1} parent=0 // loop_pre_header
    _
  $region3: #{tpu_custom_call.1} parent=0 // loop_header
    %s9 = sphi 0, %s13
    %p10 = scmp.ge.s32.totalorder %s9, 4
    %s19 = sphi 0, %s21
    %s22 = sphi 0, %s19
    %s23 = sphi 0, %s22
    %s39 = sphi 0, %s23
    %s43 = sphi 0, %s43
    %s45 = sphi 0, %s43
    %s46 = sphi 0, %s45
    %s60 = sphi 0, %s46
    %s64 = sphi 0, %s64
    %s66 = sphi 0, %s64
    %s67 = sphi 0, %s66
    %s81 = sphi 0, %s67
    %s87 = sphi 0, %s89
    %s90 = sphi 0, %s87
    %s91 = sphi 0, %s90
    %s107 = sphi 0, %s91
  $region4: #{tpu_custom_call.1} parent=0 // loop_header_branch
    %12 = sbr.rel (%p10) target = $region8
  $region5: #{tpu_custom_call.1} parent=0 // loop_body
    %s14 = ssub.s32 %s9, 1
    %s15 = ssub.s32 %s9, 2
    %s16 = sadd.s32 %s9, 1
    %s17 = ssub.s32 %s9, %s16
    %p18 = scmp.eq.s32.totalorder %s17, 0
    %s20 = sadd.s32 %s19, 1
    %s21 = scalar_select %p18, %s19, %s20
    %p24 = pneg %p18
    %p25 = scmp.eq.s32.totalorder %s9, 1
    %p26 = por %p24, %p25
    %p27 = scmp.ne.s32.totalorder %s19, %s22
    %p28 = scmp.eq.s32.totalorder %s9, 0
    %p29 = por %p27, %p28
    %p30 = scmp.ne.s32.totalorder %s19, %s22
    %p31 = scmp.eq.s32.totalorder %s14, 1
    %p32 = por %p30, %p31
    %p33 = scmp.ne.s32.totalorder %s22, %s23
    %p34 = scmp.eq.s32.totalorder %s14, 0
    %p35 = por %p33, %p34
    %p36 = scmp.ne.s32.totalorder %s22, %s23
    %p37 = scmp.eq.s32.totalorder %s15, 1
    %p38 = por %p36, %p37
    %p40 = scmp.ne.s32.totalorder %s23, %s39
    %p41 = scmp.eq.s32.totalorder %s15, 0
    %p42 = por %p40, %p41
    %s44 = sadd.s32 %s43, 1
    %p47 = scmp.eq.s32.totalorder %s9, 1
    %p48 = scmp.ne.s32.totalorder %s43, %s45
    %p49 = scmp.eq.s32.totalorder %s9, 0
    %p50 = por %p48, %p49
    %p51 = scmp.ne.s32.totalorder %s43, %s45
    %p52 = scmp.eq.s32.totalorder %s14, 1
    %p53 = por %p51, %p52
    %p54 = scmp.ne.s32.totalorder %s45, %s46
    %p55 = scmp.eq.s32.totalorder %s14, 0
    %p56 = por %p54, %p55
    %p57 = scmp.ne.s32.totalorder %s45, %s46
    %p58 = scmp.eq.s32.totalorder %s15, 1
    %p59 = por %p57, %p58
    %p61 = scmp.ne.s32.totalorder %s46, %s60
    %p62 = scmp.eq.s32.totalorder %s15, 0
    %p63 = por %p61, %p62
    %s65 = sadd.s32 %s64, 1
    %p68 = scmp.eq.s32.totalorder %s9, 1
    %p69 = scmp.ne.s32.totalorder %s64, %s66
    %p70 = scmp.eq.s32.totalorder %s9, 0
    %p71 = por %p69, %p70
    %p72 = scmp.ne.s32.totalorder %s64, %s66
    %p73 = scmp.eq.s32.totalorder %s14, 1
    %p74 = por %p72, %p73
    %p75 = scmp.ne.s32.totalorder %s66, %s67
    %p76 = scmp.eq.s32.totalorder %s14, 0
    %p77 = por %p75, %p76
    %p78 = scmp.ne.s32.totalorder %s66, %s67
    %p79 = scmp.eq.s32.totalorder %s15, 1
    %p80 = por %p78, %p79
    %p82 = scmp.ne.s32.totalorder %s67, %s81
    %p83 = scmp.eq.s32.totalorder %s15, 0
    %p84 = por %p82, %p83
    %s85 = ssub.s32 %s9, %s16
    %p86 = scmp.eq.s32.totalorder %s85, 0
    %s88 = sadd.s32 %s87, 1
    %s89 = scalar_select %p86, %s87, %s88
    %p92 = pneg %p86
    %p93 = scmp.eq.s32.totalorder %s9, 1
    %p94 = por %p92, %p93
    %p95 = scmp.ne.s32.totalorder %s87, %s90
    %p96 = scmp.eq.s32.totalorder %s9, 0
    %p97 = por %p95, %p96
    %p98 = scmp.ne.s32.totalorder %s87, %s90
    %p99 = scmp.eq.s32.totalorder %s14, 1
    %p100 = por %p98, %p99
    %p101 = scmp.ne.s32.totalorder %s90, %s91
    %p102 = scmp.eq.s32.totalorder %s14, 0
    %p103 = por %p101, %p102
    %p104 = scmp.ne.s32.totalorder %s90, %s91
    %p105 = scmp.eq.s32.totalorder %s15, 1
    %p106 = por %p104, %p105
    %p108 = scmp.ne.s32.totalorder %s91, %s107
    %p109 = scmp.eq.s32.totalorder %s15, 0
    %p110 = por %p108, %p109
    %p111 = scmp.le.s32.totalorder 1, %s9
    %p112 = scmp.lt.s32.totalorder %s9, 3
    %p113 = pnand %p111, %p112
    %p114 = pneg %p113
    // Predicated region
    $region9: #{tpu_custom_call.1} parent=5 // pred_check
      _
    $region10: #{tpu_custom_call.1} parent=5 // pred_check_branch
      %116 = sbr.rel (%p113) target = $region12
    $region11: #{tpu_custom_call.1} parent=5 // pred_region
      %s117 = ssub.s32 %s9, 1
      // Predicated region
      $region13: #{tpu_custom_call.1} parent=11 // pred_check
        %p118 = pneg %p56
      $region14: #{tpu_custom_call.1} parent=11 // pred_check_branch
        %120 = sbr.rel (%p118) target = $region16
      $region15: #{tpu_custom_call.1} parent=11 // pred_region
        _
      $region16: #{tpu_custom_call.1} parent=11 // pred_fallthru
        _
      // Predicated region
      $region17: #{tpu_custom_call.1} parent=11 // pred_check
        %p121 = pneg %p77
      $region18: #{tpu_custom_call.1} parent=11 // pred_check_branch
        %123 = sbr.rel (%p121) target = $region20
      $region19: #{tpu_custom_call.1} parent=11 // pred_region
        _
      $region20: #{tpu_custom_call.1} parent=11 // pred_fallthru
        _
    $region12: #{tpu_custom_call.1} parent=5 // pred_fallthru
      _
    %p124 = scmp.lt.s32.totalorder %s9, 2
    // Predicated region
    $region21: #{tpu_custom_call.1} parent=5 // pred_check
      %p125 = pneg %p124
    $region22: #{tpu_custom_call.1} parent=5 // pred_check_branch
      %127 = sbr.rel (%p125) target = $region24
    $region23: #{tpu_custom_call.1} parent=5 // pred_region
      // Predicated region
      $region25: #{tpu_custom_call.1} parent=23 // pred_check
        %p128 = pneg %p29
      $region26: #{tpu_custom_call.1} parent=23 // pred_check_branch
        %130 = sbr.rel (%p128) target = $region28
      $region27: #{tpu_custom_call.1} parent=23 // pred_region
        %s131 = smul.u32 16, %s9
        %p132 = scmp.lt.s32.totalorder %s131, 31
        %s133 = scalar_select %p132, %s131, 31
        %s134 = smul.addr %s133, 8
        %s135 = scalar_lea.vmem %s0, %s134
        %s136 = smul.u32 16, %s9
      $region28: #{tpu_custom_call.1} parent=23 // pred_fallthru
        _
    $region24: #{tpu_custom_call.1} parent=5 // pred_fallthru
      _
    %p137 = scmp.le.s32.totalorder 1, %s9
    %p138 = scmp.lt.s32.totalorder %s9, 3
    %p139 = pnand %p137, %p138
    %p140 = pneg %p139
    // Predicated region
    $region29: #{tpu_custom_call.1} parent=5 // pred_check
      _
    $region30: #{tpu_custom_call.1} parent=5 // pred_check_branch
      %142 = sbr.rel (%p139) target = $region32
    $region31: #{tpu_custom_call.1} parent=5 // pred_region
      %s143 = ssub.s32 %s9, 1
      %s144 = smul.u32 16, %s14
      %p145 = scmp.lt.s32.totalorder %s144, 31
      %s146 = scalar_select %p145, %s144, 31
      %s147 = smul.addr %s146, 8
      %s148 = scalar_lea.vmem %s0, %s147
      %p149 = pneg %p35
      %p150 = pneg %p32
      %p151 = pneg %p56
      %p152 = pneg %p53
      %p153 = pneg %p77
      %p154 = pneg %p74
      %p155 = pneg %p103
      %p156 = pneg %p100
      %s157 = smul.u32 16, %s14
      %p158 = scmp.lt.s32.totalorder %s157, 31
      %s159 = scalar_select %p158, %s157, 31
      %s160 = smul.addr %s159, 8
      %s161 = scalar_lea.vmem %s3, %s160
      %s162 = smul.u32 16, %s14
      %p163 = scmp.lt.s32.totalorder %s162, 31
      %s164 = scalar_select %p163, %s162, 31
      %s165 = smul.addr %s164, 8
      %s166 = scalar_lea.vmem %s0, %s165
      %s167 = smul.u32 16, %s14
      %s168 = smul.u32 16, %s14
      %p169 = scmp.lt.s32.totalorder %s168, 31
      %s170 = scalar_select %p169, %s168, 31
      %s171 = smul.addr %s170, 8
      %s172 = scalar_lea.vmem %s3, %s171
      %s173 = smul.u32 16, %s14
      %v174 = vld [vmem:[%s166] sm:$0xff]
      %v175 = vld [vmem:[%s166 + $0x8] sm:$0xff]
      %v176 = vld [vmem:[%s166 + $0x10] sm:$0xff]
      %v177 = vld [vmem:[%s166 + $0x18] sm:$0xff]
      %v178 = vld [vmem:[%s166 + $0x20] sm:$0xff]
      %v179 = vld [vmem:[%s166 + $0x28] sm:$0xff]
      %v180 = vld [vmem:[%s166 + $0x30] sm:$0xff]
      %v181 = vld [vmem:[%s166 + $0x38] sm:$0xff]
      %v182 = vld [vmem:[%s166 + $0x40] sm:$0xff]
      %v183 = vld [vmem:[%s166 + $0x48] sm:$0xff]
      %v184 = vld [vmem:[%s166 + $0x50] sm:$0xff]
      %v185 = vld [vmem:[%s166 + $0x58] sm:$0xff]
      %v186 = vld [vmem:[%s166 + $0x60] sm:$0xff]
      %v187 = vld [vmem:[%s166 + $0x68] sm:$0xff]
      %v188 = vld [vmem:[%s166 + $0x70] sm:$0xff]
      %v189 = vld [vmem:[%s166 + $0x78] sm:$0xff]
      %v190 = vld [vmem:[%s1] sm:$0xff]
      %v191 = vld [vmem:[%s1 + $0x8] sm:$0xff]
      %v192 = vld [vmem:[%s2] sm:$0x1]
      %v193 = vlaneseq
      %v194 = vshrl.u32 %v193, 7
      %v195 = vsub.s32 0, %v194
      %v196 = vrot.slane %v192, %v195
      %vm197 = vcmask 130048
      %v199 = vsel %vm197, %v174, 0
      %v202 = vsel %vm197, %v175, 0
      %v205 = vsel %vm197, %v176, 0
      %v208 = vsel %vm197, %v177, 0
      %v211 = vsel %vm197, %v178, 0
      %v214 = vsel %vm197, %v179, 0
      %v217 = vsel %vm197, %v180, 0
      %v220 = vsel %vm197, %v181, 0
      %v223 = vsel %vm197, %v182, 0
      %v226 = vsel %vm197, %v183, 0
      %v229 = vsel %vm197, %v184, 0
      %v232 = vsel %vm197, %v185, 0
      %v235 = vsel %vm197, %v186, 0
      %v238 = vsel %vm197, %v187, 0
      %v241 = vsel %vm197, %v188, 0
      %v244 = vsel %vm197, %v189, 0
      %246 = vmatprep.subr.mxu0 0.0
      %247 = vmatpush1.msra.mxu0 %v190
      %248 = vmatprep.subr.mxu0 0.0
      %249 = vmatpush1.msra.mxu0 %v191
      %250 = vmatprep.subr.mxu0 0.0
      %251 = vmatpush1.msra.mxu0 0.0
      %252 = vmatprep.subr.mxu0 0.0
      %253 = vmatpush1.msra.mxu0 0.0
      %254 = vmatprep.subr.mxu0 0.0
      %255 = vmatpush1.msra.mxu0 0.0
      %256 = vmatprep.subr.mxu0 0.0
      %257 = vmatpush1.msra.mxu0 0.0
      %258 = vmatprep.subr.mxu0 0.0
      %259 = vmatpush1.msra.mxu0 0.0
      %260 = vmatprep.subr.mxu0 0.0
      %261 = vmatpush1.msra.mxu0 0.0
      %262 = vmatprep.subr.mxu0 0.0
      %263 = vmatpush1.msra.mxu0 0.0
      %264 = vmatprep.subr.mxu0 0.0
      %265 = vmatpush1.msra.mxu0 0.0
      %266 = vmatprep.subr.mxu0 0.0
      %267 = vmatpush1.msra.mxu0 0.0
      %268 = vmatprep.subr.mxu0 0.0
      %269 = vmatpush1.msra.mxu0 0.0
      %270 = vmatprep.subr.mxu0 0.0
      %271 = vmatpush1.msra.mxu0 0.0
      %272 = vmatprep.subr.mxu0 0.0
      %273 = vmatpush1.msra.mxu0 0.0
      %274 = vmatprep.subr.mxu0 0.0
      %275 = vmatpush1.msra.mxu0 0.0
      %276 = vmatprep.subr.mxu0 0.0
      %277 = vmatpush1.msra.mxu0 0.0
      %278 = vmatprep.subr.mxu0 0.0
      %279 = vmatpush1.msra.mxu0 0.0
      %280 = vmatprep.subr.mxu0 0.0
      %281 = vmatpush1.msra.mxu0 0.0
      %282 = vmatprep.subr.mxu0 0.0
      %283 = vmatpush1.msra.mxu0 0.0
      %284 = vmatprep.subr.mxu0 0.0
      %285 = vmatpush1.msra.mxu0 0.0
      %286 = vmatprep.subr.mxu0 0.0
      %287 = vmatpush1.msra.mxu0 0.0
      %288 = vmatprep.subr.mxu0 0.0
      %289 = vmatpush1.msra.mxu0 0.0
      %290 = vmatprep.subr.mxu0 0.0
      %291 = vmatpush1.msra.mxu0 0.0
      %292 = vmatprep.subr.mxu0 0.0
      %293 = vmatpush1.msra.mxu0 0.0
      %294 = vmatprep.subr.mxu0 0.0
      %295 = vmatpush1.msra.mxu0 0.0
      %296 = vmatprep.subr.mxu0 0.0
      %297 = vmatpush1.msra.mxu0 0.0
      %298 = vmatprep.subr.mxu0 0.0
      %299 = vmatpush1.msra.mxu0 0.0
      %300 = vmatprep.subr.mxu0 0.0
      %301 = vmatpush1.msra.mxu0 0.0
      %302 = vmatprep.subr.mxu0 0.0
      %303 = vmatpush1.msra.mxu0 0.0
      %304 = vmatprep.subr.mxu0 0.0
      %305 = vmatpush1.msra.mxu0 0.0
      %306 = vmatprep.subr.mxu0 0.0
      %307 = vmatpush1.msra.mxu0 0.0
      %308 = vmatprep.subr.mxu0 0.0
      %309 = vmatpush1.msra.mxu0 0.0
      %310 = vmatprep.mubr.f32.mxu0 0.0
      %311 = vmatmul.mubr.f32.gmra.mrb[0].mxu0 %v199
      %v312 = vpop.f32.mrb[0].mxu0
      %v313 = vadd.f32 %v196, %v312
      %v314 = vpop.f32.mrb[0].mxu0
      %315 = vmatprep.mubr.f32.mxu0 0.0
      %316 = vmatmul.mubr.f32.gmra.mrb[0].mxu0 %v202
      %v317 = vpop.f32.mrb[0].mxu0
      %v318 = vadd.f32 %v196, %v317
      %v319 = vpop.f32.mrb[0].mxu0
      %320 = vmatprep.mubr.f32.mxu0 0.0
      %321 = vmatmul.mubr.f32.gmra.mrb[0].mxu0 %v205
      %v322 = vpop.f32.mrb[0].mxu0
      %v323 = vadd.f32 %v196, %v322
      %v324 = vpop.f32.mrb[0].mxu0
      %325 = vmatprep.mubr.f32.mxu0 0.0
      %326 = vmatmul.mubr.f32.gmra.mrb[0].mxu0 %v208
      %v327 = vpop.f32.mrb[0].mxu0
      %v328 = vadd.f32 %v196, %v327
      %v329 = vpop.f32.mrb[0].mxu0
      %330 = vmatprep.mubr.f32.mxu0 0.0
      %331 = vmatmul.mubr.f32.gmra.mrb[0].mxu0 %v211
      %v332 = vpop.f32.mrb[0].mxu0
      %v333 = vadd.f32 %v196, %v332
      %v334 = vpop.f32.mrb[0].mxu0
      %335 = vmatprep.mubr.f32.mxu0 0.0
      %336 = vmatmul.mubr.f32.gmra.mrb[0].mxu0 %v214
      %v337 = vpop.f32.mrb[0].mxu0
      %v338 = vadd.f32 %v196, %v337
      %v339 = vpop.f32.mrb[0].mxu0
      %340 = vmatprep.mubr.f32.mxu0 0.0
      %341 = vmatmul.mubr.f32.gmra.mrb[0].mxu0 %v217
      %v342 = vpop.f32.mrb[0].mxu0
      %v343 = vadd.f32 %v196, %v342
      %v344 = vpop.f32.mrb[0].mxu0
      %345 = vmatprep.mubr.f32.mxu0 0.0
      %346 = vmatmul.mubr.f32.gmra.mrb[0].mxu0 %v220
      %v347 = vpop.f32.mrb[0].mxu0
      %v348 = vadd.f32 %v196, %v347
      %v349 = vpop.f32.mrb[0].mxu0
      %350 = vmatprep.mubr.f32.mxu0 0.0
      %351 = vmatmul.mubr.f32.gmra.mrb[0].mxu0 %v223
      %v352 = vpop.f32.mrb[0].mxu0
      %v353 = vadd.f32 %v196, %v352
      %v354 = vpop.f32.mrb[0].mxu0
      %355 = vmatprep.mubr.f32.mxu0 0.0
      %356 = vmatmul.mubr.f32.gmra.mrb[0].mxu0 %v226
      %v357 = vpop.f32.mrb[0].mxu0
      %v358 = vadd.f32 %v196, %v357
      %v359 = vpop.f32.mrb[0].mxu0
      %360 = vmatprep.mubr.f32.mxu0 0.0
      %361 = vmatmul.mubr.f32.gmra.mrb[0].mxu0 %v229
      %v362 = vpop.f32.mrb[0].mxu0
      %v363 = vadd.f32 %v196, %v362
      %v364 = vpop.f32.mrb[0].mxu0
      %365 = vmatprep.mubr.f32.mxu0 0.0
      %366 = vmatmul.mubr.f32.gmra.mrb[0].mxu0 %v232
      %v367 = vpop.f32.mrb[0].mxu0
      %v368 = vadd.f32 %v196, %v367
      %v369 = vpop.f32.mrb[0].mxu0
      %370 = vmatprep.mubr.f32.mxu0 0.0
      %371 = vmatmul.mubr.f32.gmra.mrb[0].mxu0 %v235
      %v372 = vpop.f32.mrb[0].mxu0
      %v373 = vadd.f32 %v196, %v372
      %v374 = vpop.f32.mrb[0].mxu0
      %375 = vmatprep.mubr.f32.mxu0 0.0
      %376 = vmatmul.mubr.f32.gmra.mrb[0].mxu0 %v238
      %v377 = vpop.f32.mrb[0].mxu0
      %v378 = vadd.f32 %v196, %v377
      %v379 = vpop.f32.mrb[0].mxu0
      %380 = vmatprep.mubr.f32.mxu0 0.0
      %381 = vmatmul.mubr.f32.gmra.mrb[0].mxu0 %v241
      %v382 = vpop.f32.mrb[0].mxu0
      %v383 = vadd.f32 %v196, %v382
      %v384 = vpop.f32.mrb[0].mxu0
      %385 = vmatprep.mubr.f32.mxu0 0.0
      %386 = vmatmul.mubr.f32.gmra.mrb[0].mxu0 %v244
      %v387 = vpop.f32.mrb[0].mxu0
      %v388 = vadd.f32 %v196, %v387
      %v389 = vpop.f32.mrb[0].mxu0
      %390 = vdwg.mxu0
      %v391 = vmax.f32 %v313, 0.0
      %v392 = vmax.f32 %v318, 0.0
      %v393 = vmax.f32 %v323, 0.0
      %v394 = vmax.f32 %v328, 0.0
      %v395 = vmax.f32 %v333, 0.0
      %v396 = vmax.f32 %v338, 0.0
      %v397 = vmax.f32 %v343, 0.0
      %v398 = vmax.f32 %v348, 0.0
      %v399 = vmax.f32 %v353, 0.0
      %v400 = vmax.f32 %v358, 0.0
      %v401 = vmax.f32 %v363, 0.0
      %v402 = vmax.f32 %v368, 0.0
      %v403 = vmax.f32 %v373, 0.0
      %v404 = vmax.f32 %v378, 0.0
      %v405 = vmax.f32 %v383, 0.0
      %v406 = vmax.f32 %v388, 0.0
      %v407 = vld [vmem:[%s1 + $0x40] sm:$0xff]
      %v408 = vld [vmem:[%s1 + $0x48] sm:$0xff]
      %v409 = vld [vmem:[%s1 + $0x50] sm:$0xff]
      %v410 = vld [vmem:[%s1 + $0x58] sm:$0xff]
      %v411 = vld [vmem:[%s2 + $0x1] sm:$0x1]
      %v412 = vlaneseq
      %v413 = vshrl.u32 %v412, 7
      %v414 = vsub.s32 0, %v413
      %v415 = vrot.slane %v411, %v414
      %vm416 = vcmask 261120
      %v418 = vsel %vm416, %v391, 0
      %v421 = vsel %vm416, %v392, 0
      %v424 = vsel %vm416, %v393, 0
      %v427 = vsel %vm416, %v394, 0
      %v430 = vsel %vm416, %v395, 0
      %v433 = vsel %vm416, %v396, 0
      %v436 = vsel %vm416, %v397, 0
      %v439 = vsel %vm416, %v398, 0
      %v442 = vsel %vm416, %v399, 0
      %v445 = vsel %vm416, %v400, 0
      %v448 = vsel %vm416, %v401, 0
      %v451 = vsel %vm416, %v402, 0
      %v454 = vsel %vm416, %v403, 0
      %v457 = vsel %vm416, %v404, 0
      %v460 = vsel %vm416, %v405, 0
      %v463 = vsel %vm416, %v406, 0
      %465 = vmatprep.subr.mxu0 0.0
      %466 = vmatpush1.msra.mxu0 %v407
      %467 = vmatprep.subr.mxu0 0.0
      %468 = vmatpush1.msra.mxu0 %v408
      %469 = vmatprep.subr.mxu0 0.0
      %470 = vmatpush1.msra.mxu0 %v409
      %471 = vmatprep.subr.mxu0 0.0
      %472 = vmatpush1.msra.mxu0 %v410
      %473 = vmatprep.subr.mxu0 0.0
      %474 = vmatpush1.msra.mxu0 0.0
      %475 = vmatprep.subr.mxu0 0.0
      %476 = vmatpush1.msra.mxu0 0.0
      %477 = vmatprep.subr.mxu0 0.0
      %478 = vmatpush1.msra.mxu0 0.0
      %479 = vmatprep.subr.mxu0 0.0
      %480 = vmatpush1.msra.mxu0 0.0
      %481 = vmatprep.subr.mxu0 0.0
      %482 = vmatpush1.msra.mxu0 0.0
      %483 = vmatprep.subr.mxu0 0.0
      %484 = vmatpush1.msra.mxu0 0.0
      %485 = vmatprep.subr.mxu0 0.0
      %486 = vmatpush1.msra.mxu0 0.0
      %487 = vmatprep.subr.mxu0 0.0
      %488 = vmatpush1.msra.mxu0 0.0
      %489 = vmatprep.subr.mxu0 0.0
      %490 = vmatpush1.msra.mxu0 0.0
      %491 = vmatprep.subr.mxu0 0.0
      %492 = vmatpush1.msra.mxu0 0.0
      %493 = vmatprep.subr.mxu0 0.0
      %494 = vmatpush1.msra.mxu0 0.0
      %495 = vmatprep.subr.mxu0 0.0
      %496 = vmatpush1.msra.mxu0 0.0
      %497 = vmatprep.subr.mxu0 0.0
      %498 = vmatpush1.msra.mxu0 0.0
      %499 = vmatprep.subr.mxu0 0.0
      %500 = vmatpush1.msra.mxu0 0.0
      %501 = vmatprep.subr.mxu0 0.0
      %502 = vmatpush1.msra.mxu0 0.0
      %503 = vmatprep.subr.mxu0 0.0
      %504 = vmatpush1.msra.mxu0 0.0
      %505 = vmatprep.subr.mxu0 0.0
      %506 = vmatpush1.msra.mxu0 0.0
      %507 = vmatprep.subr.mxu0 0.0
      %508 = vmatpush1.msra.mxu0 0.0
      %509 = vmatprep.subr.mxu0 0.0
      %510 = vmatpush1.msra.mxu0 0.0
      %511 = vmatprep.subr.mxu0 0.0
      %512 = vmatpush1.msra.mxu0 0.0
      %513 = vmatprep.subr.mxu0 0.0
      %514 = vmatpush1.msra.mxu0 0.0
      %515 = vmatprep.subr.mxu0 0.0
      %516 = vmatpush1.msra.mxu0 0.0
      %517 = vmatprep.subr.mxu0 0.0
      %518 = vmatpush1.msra.mxu0 0.0
      %519 = vmatprep.subr.mxu0 0.0
      %520 = vmatpush1.msra.mxu0 0.0
      %521 = vmatprep.subr.mxu0 0.0
      %522 = vmatpush1.msra.mxu0 0.0
      %523 = vmatprep.subr.mxu0 0.0
      %524 = vmatpush1.msra.mxu0 0.0
      %525 = vmatprep.subr.mxu0 0.0
      %526 = vmatpush1.msra.mxu0 0.0
      %527 = vmatprep.subr.mxu0 0.0
      %528 = vmatpush1.msra.mxu0 0.0
      %529 = vmatprep.mubr.f32.mxu0 0.0
      %530 = vmatmul.mubr.f32.gmra.mrb[0].mxu0 %v418
      %v531 = vpop.f32.mrb[0].mxu0
      %v532 = vadd.f32 %v415, %v531
      %v533 = vpop.f32.mrb[0].mxu0
      %534 = vmatprep.mubr.f32.mxu0 0.0
      %535 = vmatmul.mubr.f32.gmra.mrb[0].mxu0 %v421
      %v536 = vpop.f32.mrb[0].mxu0
      %v537 = vadd.f32 %v415, %v536
      %v538 = vpop.f32.mrb[0].mxu0
      %539 = vmatprep.mubr.f32.mxu0 0.0
      %540 = vmatmul.mubr.f32.gmra.mrb[0].mxu0 %v424
      %v541 = vpop.f32.mrb[0].mxu0
      %v542 = vadd.f32 %v415, %v541
      %v543 = vpop.f32.mrb[0].mxu0
      %544 = vmatprep.mubr.f32.mxu0 0.0
      %545 = vmatmul.mubr.f32.gmra.mrb[0].mxu0 %v427
      %v546 = vpop.f32.mrb[0].mxu0
      %v547 = vadd.f32 %v415, %v546
      %v548 = vpop.f32.mrb[0].mxu0
      %549 = vmatprep.mubr.f32.mxu0 0.0
      %550 = vmatmul.mubr.f32.gmra.mrb[0].mxu0 %v430
      %v551 = vpop.f32.mrb[0].mxu0
      %v552 = vadd.f32 %v415, %v551
      %v553 = vpop.f32.mrb[0].mxu0
      %554 = vmatprep.mubr.f32.mxu0 0.0
      %555 = vmatmul.mubr.f32.gmra.mrb[0].mxu0 %v433
      %v556 = vpop.f32.mrb[0].mxu0
      %v557 = vadd.f32 %v415, %v556
      %v558 = vpop.f32.mrb[0].mxu0
      %559 = vmatprep.mubr.f32.mxu0 0.0
      %560 = vmatmul.mubr.f32.gmra.mrb[0].mxu0 %v436
      %v561 = vpop.f32.mrb[0].mxu0
      %v562 = vadd.f32 %v415, %v561
      %v563 = vpop.f32.mrb[0].mxu0
      %564 = vmatprep.mubr.f32.mxu0 0.0
      %565 = vmatmul.mubr.f32.gmra.mrb[0].mxu0 %v439
      %v566 = vpop.f32.mrb[0].mxu0
      %v567 = vadd.f32 %v415, %v566
      %v568 = vpop.f32.mrb[0].mxu0
      %569 = vmatprep.mubr.f32.mxu0 0.0
      %570 = vmatmul.mubr.f32.gmra.mrb[0].mxu0 %v442
      %v571 = vpop.f32.mrb[0].mxu0
      %v572 = vadd.f32 %v415, %v571
      %v573 = vpop.f32.mrb[0].mxu0
      %574 = vmatprep.mubr.f32.mxu0 0.0
      %575 = vmatmul.mubr.f32.gmra.mrb[0].mxu0 %v445
      %v576 = vpop.f32.mrb[0].mxu0
      %v577 = vadd.f32 %v415, %v576
      %v578 = vpop.f32.mrb[0].mxu0
      %579 = vmatprep.mubr.f32.mxu0 0.0
      %580 = vmatmul.mubr.f32.gmra.mrb[0].mxu0 %v448
      %v581 = vpop.f32.mrb[0].mxu0
      %v582 = vadd.f32 %v415, %v581
      %v583 = vpop.f32.mrb[0].mxu0
      %584 = vmatprep.mubr.f32.mxu0 0.0
      %585 = vmatmul.mubr.f32.gmra.mrb[0].mxu0 %v451
      %v586 = vpop.f32.mrb[0].mxu0
      %v587 = vadd.f32 %v415, %v586
      %v588 = vpop.f32.mrb[0].mxu0
      %589 = vmatprep.mubr.f32.mxu0 0.0
      %590 = vmatmul.mubr.f32.gmra.mrb[0].mxu0 %v454
      %v591 = vpop.f32.mrb[0].mxu0
      %v592 = vadd.f32 %v415, %v591
      %v593 = vpop.f32.mrb[0].mxu0
      %594 = vmatprep.mubr.f32.mxu0 0.0
      %595 = vmatmul.mubr.f32.gmra.mrb[0].mxu0 %v457
      %v596 = vpop.f32.mrb[0].mxu0
      %v597 = vadd.f32 %v415, %v596
      %v598 = vpop.f32.mrb[0].mxu0
      %599 = vmatprep.mubr.f32.mxu0 0.0
      %600 = vmatmul.mubr.f32.gmra.mrb[0].mxu0 %v460
      %v601 = vpop.f32.mrb[0].mxu0
      %v602 = vadd.f32 %v415, %v601
      %v603 = vpop.f32.mrb[0].mxu0
      %604 = vmatprep.mubr.f32.mxu0 0.0
      %605 = vmatmul.mubr.f32.gmra.mrb[0].mxu0 %v463
      %v606 = vpop.f32.mrb[0].mxu0
      %v607 = vadd.f32 %v415, %v606
      %v608 = vpop.f32.mrb[0].mxu0
      %609 = vdwg.mxu0
      %v610 = vmax.f32 %v532, 0.0
      %v611 = vmax.f32 %v537, 0.0
      %v612 = vmax.f32 %v542, 0.0
      %v613 = vmax.f32 %v547, 0.0
      %v614 = vmax.f32 %v552, 0.0
      %v615 = vmax.f32 %v557, 0.0
      %v616 = vmax.f32 %v562, 0.0
      %v617 = vmax.f32 %v567, 0.0
      %v618 = vmax.f32 %v572, 0.0
      %v619 = vmax.f32 %v577, 0.0
      %v620 = vmax.f32 %v582, 0.0
      %v621 = vmax.f32 %v587, 0.0
      %v622 = vmax.f32 %v592, 0.0
      %v623 = vmax.f32 %v597, 0.0
      %v624 = vmax.f32 %v602, 0.0
      %v625 = vmax.f32 %v607, 0.0
      %v626 = vld [vmem:[%s1 + $0x80] sm:$0xff]
      %v627 = vld [vmem:[%s1 + $0x88] sm:$0xff]
      %v628 = vld [vmem:[%s1 + $0x90] sm:$0xff]
      %v629 = vld [vmem:[%s1 + $0x98] sm:$0xff]
      %v630 = vld [vmem:[%s2 + $0x2] sm:$0x1]
      %v631 = vlaneseq
      %v632 = vshrl.u32 %v631, 7
      %v633 = vsub.s32 0, %v632
      %v634 = vrot.slane %v630, %v633
      %v636 = vsel %vm416, %v610, 0
      %v639 = vsel %vm416, %v611, 0
      %v642 = vsel %vm416, %v612, 0
      %v645 = vsel %vm416, %v613, 0
      %v648 = vsel %vm416, %v614, 0
      %v651 = vsel %vm416, %v615, 0
      %v654 = vsel %vm416, %v616, 0
      %v657 = vsel %vm416, %v617, 0
      %v660 = vsel %vm416, %v618, 0
      %v663 = vsel %vm416, %v619, 0
      %v666 = vsel %vm416, %v620, 0
      %v669 = vsel %vm416, %v621, 0
      %v672 = vsel %vm416, %v622, 0
      %v675 = vsel %vm416, %v623, 0
      %v678 = vsel %vm416, %v624, 0
      %v681 = vsel %vm416, %v625, 0
      %683 = vmatprep.subr.mxu0 0.0
      %684 = vmatpush1.msra.mxu0 %v626
      %685 = vmatprep.subr.mxu0 0.0
      %686 = vmatpush1.msra.mxu0 %v627
      %687 = vmatprep.subr.mxu0 0.0
      %688 = vmatpush1.msra.mxu0 %v628
      %689 = vmatprep.subr.mxu0 0.0
      %690 = vmatpush1.msra.mxu0 %v629
      %691 = vmatprep.subr.mxu0 0.0
      %692 = vmatpush1.msra.mxu0 0.0
      %693 = vmatprep.subr.mxu0 0.0
      %694 = vmatpush1.msra.mxu0 0.0
      %695 = vmatprep.subr.mxu0 0.0
      %696 = vmatpush1.msra.mxu0 0.0
      %697 = vmatprep.subr.mxu0 0.0
      %698 = vmatpush1.msra.mxu0 0.0
      %699 = vmatprep.subr.mxu0 0.0
      %700 = vmatpush1.msra.mxu0 0.0
      %701 = vmatprep.subr.mxu0 0.0
      %702 = vmatpush1.msra.mxu0 0.0
      %703 = vmatprep.subr.mxu0 0.0
      %704 = vmatpush1.msra.mxu0 0.0
      %705 = vmatprep.subr.mxu0 0.0
      %706 = vmatpush1.msra.mxu0 0.0
      %707 = vmatprep.subr.mxu0 0.0
      %708 = vmatpush1.msra.mxu0 0.0
      %709 = vmatprep.subr.mxu0 0.0
      %710 = vmatpush1.msra.mxu0 0.0
      %711 = vmatprep.subr.mxu0 0.0
      %712 = vmatpush1.msra.mxu0 0.0
      %713 = vmatprep.subr.mxu0 0.0
      %714 = vmatpush1.msra.mxu0 0.0
      %715 = vmatprep.subr.mxu0 0.0
      %716 = vmatpush1.msra.mxu0 0.0
      %717 = vmatprep.subr.mxu0 0.0
      %718 = vmatpush1.msra.mxu0 0.0
      %719 = vmatprep.subr.mxu0 0.0
      %720 = vmatpush1.msra.mxu0 0.0
      %721 = vmatprep.subr.mxu0 0.0
      %722 = vmatpush1.msra.mxu0 0.0
      %723 = vmatprep.subr.mxu0 0.0
      %724 = vmatpush1.msra.mxu0 0.0
      %725 = vmatprep.subr.mxu0 0.0
      %726 = vmatpush1.msra.mxu0 0.0
      %727 = vmatprep.subr.mxu0 0.0
      %728 = vmatpush1.msra.mxu0 0.0
      %729 = vmatprep.subr.mxu0 0.0
      %730 = vmatpush1.msra.mxu0 0.0
      %731 = vmatprep.subr.mxu0 0.0
      %732 = vmatpush1.msra.mxu0 0.0
      %733 = vmatprep.subr.mxu0 0.0
      %734 = vmatpush1.msra.mxu0 0.0
      %735 = vmatprep.subr.mxu0 0.0
      %736 = vmatpush1.msra.mxu0 0.0
      %737 = vmatprep.subr.mxu0 0.0
      %738 = vmatpush1.msra.mxu0 0.0
      %739 = vmatprep.subr.mxu0 0.0
      %740 = vmatpush1.msra.mxu0 0.0
      %741 = vmatprep.subr.mxu0 0.0
      %742 = vmatpush1.msra.mxu0 0.0
      %743 = vmatprep.subr.mxu0 0.0
      %744 = vmatpush1.msra.mxu0 0.0
      %745 = vmatprep.subr.mxu0 0.0
      %746 = vmatpush1.msra.mxu0 0.0
      %747 = vmatprep.mubr.f32.mxu0 0.0
      %748 = vmatmul.mubr.f32.gmra.mrb[0].mxu0 %v636
      %v749 = vpop.f32.mrb[0].mxu0
      %v750 = vadd.f32 %v634, %v749
      %v751 = vpop.f32.mrb[0].mxu0
      %752 = vmatprep.mubr.f32.mxu0 0.0
      %753 = vmatmul.mubr.f32.gmra.mrb[0].mxu0 %v639
      %v754 = vpop.f32.mrb[0].mxu0
      %v755 = vadd.f32 %v634, %v754
      %v756 = vpop.f32.mrb[0].mxu0
      %757 = vmatprep.mubr.f32.mxu0 0.0
      %758 = vmatmul.mubr.f32.gmra.mrb[0].mxu0 %v642
      %v759 = vpop.f32.mrb[0].mxu0
      %v760 = vadd.f32 %v634, %v759
      %v761 = vpop.f32.mrb[0].mxu0
      %762 = vmatprep.mubr.f32.mxu0 0.0
      %763 = vmatmul.mubr.f32.gmra.mrb[0].mxu0 %v645
      %v764 = vpop.f32.mrb[0].mxu0
      %v765 = vadd.f32 %v634, %v764
      %v766 = vpop.f32.mrb[0].mxu0
      %767 = vmatprep.mubr.f32.mxu0 0.0
      %768 = vmatmul.mubr.f32.gmra.mrb[0].mxu0 %v648
      %v769 = vpop.f32.mrb[0].mxu0
      %v770 = vadd.f32 %v634, %v769
      %v771 = vpop.f32.mrb[0].mxu0
      %772 = vmatprep.mubr.f32.mxu0 0.0
      %773 = vmatmul.mubr.f32.gmra.mrb[0].mxu0 %v651
      %v774 = vpop.f32.mrb[0].mxu0
      %v775 = vadd.f32 %v634, %v774
      %v776 = vpop.f32.mrb[0].mxu0
      %777 = vmatprep.mubr.f32.mxu0 0.0
      %778 = vmatmul.mubr.f32.gmra.mrb[0].mxu0 %v654
      %v779 = vpop.f32.mrb[0].mxu0
      %v780 = vadd.f32 %v634, %v779
      %v781 = vpop.f32.mrb[0].mxu0
      %782 = vmatprep.mubr.f32.mxu0 0.0
      %783 = vmatmul.mubr.f32.gmra.mrb[0].mxu0 %v657
      %v784 = vpop.f32.mrb[0].mxu0
      %v785 = vadd.f32 %v634, %v784
      %v786 = vpop.f32.mrb[0].mxu0
      %787 = vmatprep.mubr.f32.mxu0 0.0
      %788 = vmatmul.mubr.f32.gmra.mrb[0].mxu0 %v660
      %v789 = vpop.f32.mrb[0].mxu0
      %v790 = vadd.f32 %v634, %v789
      %v791 = vpop.f32.mrb[0].mxu0
      %792 = vmatprep.mubr.f32.mxu0 0.0
      %793 = vmatmul.mubr.f32.gmra.mrb[0].mxu0 %v663
      %v794 = vpop.f32.mrb[0].mxu0
      %v795 = vadd.f32 %v634, %v794
      %v796 = vpop.f32.mrb[0].mxu0
      %797 = vmatprep.mubr.f32.mxu0 0.0
      %798 = vmatmul.mubr.f32.gmra.mrb[0].mxu0 %v666
      %v799 = vpop.f32.mrb[0].mxu0
      %v800 = vadd.f32 %v634, %v799
      %v801 = vpop.f32.mrb[0].mxu0
      %802 = vmatprep.mubr.f32.mxu0 0.0
      %803 = vmatmul.mubr.f32.gmra.mrb[0].mxu0 %v669
      %v804 = vpop.f32.mrb[0].mxu0
      %v805 = vadd.f32 %v634, %v804
      %v806 = vpop.f32.mrb[0].mxu0
      %807 = vmatprep.mubr.f32.mxu0 0.0
      %808 = vmatmul.mubr.f32.gmra.mrb[0].mxu0 %v672
      %v809 = vpop.f32.mrb[0].mxu0
      %v810 = vadd.f32 %v634, %v809
      %v811 = vpop.f32.mrb[0].mxu0
      %812 = vmatprep.mubr.f32.mxu0 0.0
      %813 = vmatmul.mubr.f32.gmra.mrb[0].mxu0 %v675
      %v814 = vpop.f32.mrb[0].mxu0
      %v815 = vadd.f32 %v634, %v814
      %v816 = vpop.f32.mrb[0].mxu0
      %817 = vmatprep.mubr.f32.mxu0 0.0
      %818 = vmatmul.mubr.f32.gmra.mrb[0].mxu0 %v678
      %v819 = vpop.f32.mrb[0].mxu0
      %v820 = vadd.f32 %v634, %v819
      %v821 = vpop.f32.mrb[0].mxu0
      %822 = vmatprep.mubr.f32.mxu0 0.0
      %823 = vmatmul.mubr.f32.gmra.mrb[0].mxu0 %v681
      %v824 = vpop.f32.mrb[0].mxu0
      %v825 = vadd.f32 %v634, %v824
      %v826 = vpop.f32.mrb[0].mxu0
      %827 = vdwg.mxu0
      %v828 = vmax.f32 %v750, 0.0
      %v829 = vmax.f32 %v755, 0.0
      %v830 = vmax.f32 %v760, 0.0
      %v831 = vmax.f32 %v765, 0.0
      %v832 = vmax.f32 %v770, 0.0
      %v833 = vmax.f32 %v775, 0.0
      %v834 = vmax.f32 %v780, 0.0
      %v835 = vmax.f32 %v785, 0.0
      %v836 = vmax.f32 %v790, 0.0
      %v837 = vmax.f32 %v795, 0.0
      %v838 = vmax.f32 %v800, 0.0
      %v839 = vmax.f32 %v805, 0.0
      %v840 = vmax.f32 %v810, 0.0
      %v841 = vmax.f32 %v815, 0.0
      %v842 = vmax.f32 %v820, 0.0
      %v843 = vmax.f32 %v825, 0.0
      %v844 = vld [vmem:[%s1 + $0xc0] sm:$0xff]
      %v845 = vld [vmem:[%s1 + $0xc8] sm:$0xff]
      %v846 = vld [vmem:[%s1 + $0xd0] sm:$0xff]
      %v847 = vld [vmem:[%s1 + $0xd8] sm:$0xff]
      %v848 = vld [vmem:[%s1 + $0xe0] sm:$0xff]
      %v849 = vld [vmem:[%s1 + $0xe8] sm:$0xff]
      %v850 = vld [vmem:[%s1 + $0xf0] sm:$0xff]
      %v851 = vld [vmem:[%s1 + $0xf8] sm:$0xff]
      %v852 = vld [vmem:[%s2 + $0x3] sm:$0x1]
      %v853 = vlaneseq
      %v854 = vshrl.u32 %v853, 7
      %v855 = vsub.s32 0, %v854
      %v856 = vrot.slane %v852, %v855
      %vm857 = vcmask 523264
      %v859 = vsel %vm857, %v828, 0
      %v862 = vsel %vm857, %v829, 0
      %v865 = vsel %vm857, %v830, 0
      %v868 = vsel %vm857, %v831, 0
      %v871 = vsel %vm857, %v832, 0
      %v874 = vsel %vm857, %v833, 0
      %v877 = vsel %vm857, %v834, 0
      %v880 = vsel %vm857, %v835, 0
      %v883 = vsel %vm857, %v836, 0
      %v886 = vsel %vm857, %v837, 0
      %v889 = vsel %vm857, %v838, 0
      %v892 = vsel %vm857, %v839, 0
      %v895 = vsel %vm857, %v840, 0
      %v898 = vsel %vm857, %v841, 0
      %v901 = vsel %vm857, %v842, 0
      %v904 = vsel %vm857, %v843, 0
      %906 = vmatprep.subr.mxu0 0.0
      %907 = vmatpush1.msra.mxu0 %v844
      %908 = vmatprep.subr.mxu0 0.0
      %909 = vmatpush1.msra.mxu0 %v845
      %910 = vmatprep.subr.mxu0 0.0
      %911 = vmatpush1.msra.mxu0 %v846
      %912 = vmatprep.subr.mxu0 0.0
      %913 = vmatpush1.msra.mxu0 %v847
      %914 = vmatprep.subr.mxu0 0.0
      %915 = vmatpush1.msra.mxu0 %v848
      %916 = vmatprep.subr.mxu0 0.0
      %917 = vmatpush1.msra.mxu0 %v849
      %918 = vmatprep.subr.mxu0 0.0
      %919 = vmatpush1.msra.mxu0 %v850
      %920 = vmatprep.subr.mxu0 0.0
      %921 = vmatpush1.msra.mxu0 %v851
      %922 = vmatprep.subr.mxu0 0.0
      %923 = vmatpush1.msra.mxu0 0.0
      %924 = vmatprep.subr.mxu0 0.0
      %925 = vmatpush1.msra.mxu0 0.0
      %926 = vmatprep.subr.mxu0 0.0
      %927 = vmatpush1.msra.mxu0 0.0
      %928 = vmatprep.subr.mxu0 0.0
      %929 = vmatpush1.msra.mxu0 0.0
      %930 = vmatprep.subr.mxu0 0.0
      %931 = vmatpush1.msra.mxu0 0.0
      %932 = vmatprep.subr.mxu0 0.0
      %933 = vmatpush1.msra.mxu0 0.0
      %934 = vmatprep.subr.mxu0 0.0
      %935 = vmatpush1.msra.mxu0 0.0
      %936 = vmatprep.subr.mxu0 0.0
      %937 = vmatpush1.msra.mxu0 0.0
      %938 = vmatprep.subr.mxu0 0.0
      %939 = vmatpush1.msra.mxu0 0.0
      %940 = vmatprep.subr.mxu0 0.0
      %941 = vmatpush1.msra.mxu0 0.0
      %942 = vmatprep.subr.mxu0 0.0
      %943 = vmatpush1.msra.mxu0 0.0
      %944 = vmatprep.subr.mxu0 0.0
      %945 = vmatpush1.msra.mxu0 0.0
      %946 = vmatprep.subr.mxu0 0.0
      %947 = vmatpush1.msra.mxu0 0.0
      %948 = vmatprep.subr.mxu0 0.0
      %949 = vmatpush1.msra.mxu0 0.0
      %950 = vmatprep.subr.mxu0 0.0
      %951 = vmatpush1.msra.mxu0 0.0
      %952 = vmatprep.subr.mxu0 0.0
      %953 = vmatpush1.msra.mxu0 0.0
      %954 = vmatprep.subr.mxu0 0.0
      %955 = vmatpush1.msra.mxu0 0.0
      %956 = vmatprep.subr.mxu0 0.0
      %957 = vmatpush1.msra.mxu0 0.0
      %958 = vmatprep.subr.mxu0 0.0
      %959 = vmatpush1.msra.mxu0 0.0
      %960 = vmatprep.subr.mxu0 0.0
      %961 = vmatpush1.msra.mxu0 0.0
      %962 = vmatprep.subr.mxu0 0.0
      %963 = vmatpush1.msra.mxu0 0.0
      %964 = vmatprep.subr.mxu0 0.0
      %965 = vmatpush1.msra.mxu0 0.0
      %966 = vmatprep.subr.mxu0 0.0
      %967 = vmatpush1.msra.mxu0 0.0
      %968 = vmatprep.subr.mxu0 0.0
      %969 = vmatpush1.msra.mxu0 0.0
      %970 = vmatprep.mubr.f32.mxu0 0.0
      %971 = vmatmul.mubr.f32.gmra.mrb[0].mxu0 %v859
      %v972 = vpop.f32.mrb[0].mxu0
      %v973 = vadd.f32 %v856, %v972
      %v974 = vpop.f32.mrb[0].mxu0
      %975 = vmatprep.mubr.f32.mxu0 0.0
      %976 = vmatmul.mubr.f32.gmra.mrb[0].mxu0 %v862
      %v977 = vpop.f32.mrb[0].mxu0
      %v978 = vadd.f32 %v856, %v977
      %v979 = vpop.f32.mrb[0].mxu0
      %980 = vmatprep.mubr.f32.mxu0 0.0
      %981 = vmatmul.mubr.f32.gmra.mrb[0].mxu0 %v865
      %v982 = vpop.f32.mrb[0].mxu0
      %v983 = vadd.f32 %v856, %v982
      %v984 = vpop.f32.mrb[0].mxu0
      %985 = vmatprep.mubr.f32.mxu0 0.0
      %986 = vmatmul.mubr.f32.gmra.mrb[0].mxu0 %v868
      %v987 = vpop.f32.mrb[0].mxu0
      %v988 = vadd.f32 %v856, %v987
      %v989 = vpop.f32.mrb[0].mxu0
      %990 = vmatprep.mubr.f32.mxu0 0.0
      %991 = vmatmul.mubr.f32.gmra.mrb[0].mxu0 %v871
      %v992 = vpop.f32.mrb[0].mxu0
      %v993 = vadd.f32 %v856, %v992
      %v994 = vpop.f32.mrb[0].mxu0
      %995 = vmatprep.mubr.f32.mxu0 0.0
      %996 = vmatmul.mubr.f32.gmra.mrb[0].mxu0 %v874
      %v997 = vpop.f32.mrb[0].mxu0
      %v998 = vadd.f32 %v856, %v997
      %v999 = vpop.f32.mrb[0].mxu0
      %1000 = vmatprep.mubr.f32.mxu0 0.0
      %1001 = vmatmul.mubr.f32.gmra.mrb[0].mxu0 %v877
      %v1002 = vpop.f32.mrb[0].mxu0
      %v1003 = vadd.f32 %v856, %v1002
      %v1004 = vpop.f32.mrb[0].mxu0
      %1005 = vmatprep.mubr.f32.mxu0 0.0
      %1006 = vmatmul.mubr.f32.gmra.mrb[0].mxu0 %v880
      %v1007 = vpop.f32.mrb[0].mxu0
      %v1008 = vadd.f32 %v856, %v1007
      %v1009 = vpop.f32.mrb[0].mxu0
      %1010 = vmatprep.mubr.f32.mxu0 0.0
      %1011 = vmatmul.mubr.f32.gmra.mrb[0].mxu0 %v883
      %v1012 = vpop.f32.mrb[0].mxu0
      %v1013 = vadd.f32 %v856, %v1012
      %v1014 = vpop.f32.mrb[0].mxu0
      %1015 = vmatprep.mubr.f32.mxu0 0.0
      %1016 = vmatmul.mubr.f32.gmra.mrb[0].mxu0 %v886
      %v1017 = vpop.f32.mrb[0].mxu0
      %v1018 = vadd.f32 %v856, %v1017
      %v1019 = vpop.f32.mrb[0].mxu0
      %1020 = vmatprep.mubr.f32.mxu0 0.0
      %1021 = vmatmul.mubr.f32.gmra.mrb[0].mxu0 %v889
      %v1022 = vpop.f32.mrb[0].mxu0
      %v1023 = vadd.f32 %v856, %v1022
      %v1024 = vpop.f32.mrb[0].mxu0
      %1025 = vmatprep.mubr.f32.mxu0 0.0
      %1026 = vmatmul.mubr.f32.gmra.mrb[0].mxu0 %v892
      %v1027 = vpop.f32.mrb[0].mxu0
      %v1028 = vadd.f32 %v856, %v1027
      %v1029 = vpop.f32.mrb[0].mxu0
      %1030 = vmatprep.mubr.f32.mxu0 0.0
      %1031 = vmatmul.mubr.f32.gmra.mrb[0].mxu0 %v895
      %v1032 = vpop.f32.mrb[0].mxu0
      %v1033 = vadd.f32 %v856, %v1032
      %v1034 = vpop.f32.mrb[0].mxu0
      %1035 = vmatprep.mubr.f32.mxu0 0.0
      %1036 = vmatmul.mubr.f32.gmra.mrb[0].mxu0 %v898
      %v1037 = vpop.f32.mrb[0].mxu0
      %v1038 = vadd.f32 %v856, %v1037
      %v1039 = vpop.f32.mrb[0].mxu0
      %1040 = vmatprep.mubr.f32.mxu0 0.0
      %1041 = vmatmul.mubr.f32.gmra.mrb[0].mxu0 %v901
      %v1042 = vpop.f32.mrb[0].mxu0
      %v1043 = vadd.f32 %v856, %v1042
      %v1044 = vpop.f32.mrb[0].mxu0
      %1045 = vmatprep.mubr.f32.mxu0 0.0
      %1046 = vmatmul.mubr.f32.gmra.mrb[0].mxu0 %v904
      %v1047 = vpop.f32.mrb[0].mxu0
      %v1048 = vadd.f32 %v856, %v1047
      %v1049 = vpop.f32.mrb[0].mxu0
      %1050 = vdwg.mxu0
      %1051 = vst.msk [vmem:[%s172] sm:$0xff] %vm416, %v973
      %1052 = vst.msk [vmem:[%s172 + $0x8] sm:$0xff] %vm416, %v978
      %1053 = vst.msk [vmem:[%s172 + $0x10] sm:$0xff] %vm416, %v983
      %1054 = vst.msk [vmem:[%s172 + $0x18] sm:$0xff] %vm416, %v988
      %1055 = vst.msk [vmem:[%s172 + $0x20] sm:$0xff] %vm416, %v993
      %1056 = vst.msk [vmem:[%s172 + $0x28] sm:$0xff] %vm416, %v998
      %1057 = vst.msk [vmem:[%s172 + $0x30] sm:$0xff] %vm416, %v1003
      %1058 = vst.msk [vmem:[%s172 + $0x38] sm:$0xff] %vm416, %v1008
      %1059 = vst.msk [vmem:[%s172 + $0x40] sm:$0xff] %vm416, %v1013
      %1060 = vst.msk [vmem:[%s172 + $0x48] sm:$0xff] %vm416, %v1018
      %1061 = vst.msk [vmem:[%s172 + $0x50] sm:$0xff] %vm416, %v1023
      %1062 = vst.msk [vmem:[%s172 + $0x58] sm:$0xff] %vm416, %v1028
      %1063 = vst.msk [vmem:[%s172 + $0x60] sm:$0xff] %vm416, %v1033
      %1064 = vst.msk [vmem:[%s172 + $0x68] sm:$0xff] %vm416, %v1038
      %1065 = vst.msk [vmem:[%s172 + $0x70] sm:$0xff] %vm416, %v1043
      %1066 = vst.msk [vmem:[%s172 + $0x78] sm:$0xff] %vm416, %v1048
      %s1067 = smul.u32 16, %s14
      %p1068 = scmp.lt.s32.totalorder %s1067, 31
      %s1069 = scalar_select %p1068, %s1067, 31
      %s1070 = smul.addr %s1069, 8
      %s1071 = scalar_lea.vmem %s3, %s1070
      // Predicated region
      $region33: #{tpu_custom_call.1} parent=31 // pred_check
        %p1072 = pneg %p100
      $region34: #{tpu_custom_call.1} parent=31 // pred_check_branch
        %1074 = sbr.rel (%p1072) target = $region36
      $region35: #{tpu_custom_call.1} parent=31 // pred_region
        %s1075 = smul.u32 16, %s14
      $region36: #{tpu_custom_call.1} parent=31 // pred_fallthru
        _
    $region32: #{tpu_custom_call.1} parent=5 // pred_fallthru
      _
    %p1076 = scmp.le.s32.totalorder 2, %s9
    // Predicated region
    $region37: #{tpu_custom_call.1} parent=5 // pred_check
      %p1077 = pneg %p1076
    $region38: #{tpu_custom_call.1} parent=5 // pred_check_branch
      %1079 = sbr.rel (%p1077) target = $region40
    $region39: #{tpu_custom_call.1} parent=5 // pred_region
      %s1080 = ssub.s32 %s9, 2
      // Predicated region
      $region41: #{tpu_custom_call.1} parent=39 // pred_check
        %p1081 = pneg %p106
      $region42: #{tpu_custom_call.1} parent=39 // pred_check_branch
        %1083 = sbr.rel (%p1081) target = $region44
      $region43: #{tpu_custom_call.1} parent=39 // pred_region
        %s1084 = smul.u32 16, %s15
        %p1085 = scmp.lt.s32.totalorder %s1084, 31
        %s1086 = scalar_select %p1085, %s1084, 31
        %s1087 = smul.addr %s1086, 8
        %s1088 = scalar_lea.vmem %s3, %s1087
      $region44: #{tpu_custom_call.1} parent=39 // pred_fallthru
        _
    $region40: #{tpu_custom_call.1} parent=5 // pred_fallthru
      _
  $region6: #{tpu_custom_call.1} parent=0 // loop_footer
    %s13 = sadd.s32 1, %s9
  $region7: #{tpu_custom_call.1} parent=0 // loop_footer_branch
    %8 = sbr.rel target = $region3
  $region8: #{tpu_custom_call.1} parent=0 // loop_exit
    _

</llo_original>
